<compile_context>
chip_gen: v7x
topology: tpu7x:2x2x1
jax: 0.10.0
libtpu: 0.0.40
codegen_flags: <defaults>
</compile_context>

<pallas_src>
import functools
import math

import jax
import jax.numpy as jnp
from jax import lax
from jax.experimental import pallas as pl
from jax.experimental.pallas import tpu as pltpu

_LN_EPS = 1e-5                          # torch.nn.LayerNorm default eps
_VMEM_LIMIT_BYTES = 48 * 1024 * 1024


def _layer_norm(x, w, b):
    """LayerNorm over the last axis, f32 math. w / b are [1, H]."""
    mu = jnp.mean(x, axis=-1, keepdims=True)
    xc = x - mu
    var = jnp.mean(xc * xc, axis=-1, keepdims=True)
    return xc * lax.rsqrt(var + _LN_EPS) * w + b


# --------------------------------------------------------------------------- #
# Positional encoding:  X + P[:, :S, :]
# --------------------------------------------------------------------------- #
def pos_encoding_kernel(x_ref, pe_ref, o_ref):
    # TODO(synk): dropout after the positional encoding is identity at inference.
    o_ref[0] = (x_ref[0].astype(jnp.float32) + pe_ref[...]).astype(o_ref.dtype)


def add_positional_encoding(x, pe):
    B, S, H = x.shape
    return pl.pallas_call(
        pos_encoding_kernel,
        out_shape=jax.ShapeDtypeStruct((B, S, H), x.dtype),
        grid_spec=pltpu.PrefetchScalarGridSpec(
            num_scalar_prefetch=0,
            grid=(B,),
            in_specs=[pl.BlockSpec((1, S, H), lambda b: (b, 0, 0)),
                      pl.BlockSpec((S, H), lambda b: (0, 0))],
            out_specs=pl.BlockSpec((1, S, H), lambda b: (b, 0, 0)),
        ),
        compiler_params=pltpu.CompilerParams(
            dimension_semantics=("parallel",),
            vmem_limit_bytes=_VMEM_LIMIT_BYTES),
    )(x, pe)


# --------------------------------------------------------------------------- #
# Fused encoder block:  MHA -> AddNorm -> FFN -> AddNorm
# --------------------------------------------------------------------------- #
def encoder_block_kernel(x_ref, wqkv_ref, wo_ref, ln1w_ref, ln1b_ref,
                         w1_ref, b1_ref, w2_ref, b2_ref, ln2w_ref, ln2b_ref,
                         o_ref, *, num_heads, head_dim, q_tile, compute_dtype):
    S = x_ref.shape[1]
    H = x_ref.shape[2]
    nh, d = num_heads, head_dim
    cd = compute_dtype

    x_full = x_ref[0]                                   # [S, H] residual dtype
    if q_tile == S:
        x_q = x_full                                    # single query tile
    else:
        q_start = pl.multiple_of(pl.program_id(1) * q_tile, q_tile)
        x_q = x_ref[0, pl.ds(q_start, q_tile), :]       # [tq, H]

    xc_full = x_full.astype(cd)
    wqkv = wqkv_ref[...]                # [nh, H, 3d]; Q cols pre-scaled by 1/sqrt(d)

    # ---- fused head-major QKV projection: one batched MXU einsum ----------
    xb_full = jnp.broadcast_to(xc_full, (nh, S, H))
    if q_tile == S:
        qkv = jnp.einsum('hsk,hkd->hsd', xb_full, wqkv,
                         preferred_element_type=jnp.float32)        # [nh, S, 3d]
        q_h = qkv[:, :, :d]
        k_h = qkv[:, :, d:2 * d]
        v_h = qkv[:, :, 2 * d:]
    else:
        xb_q = jnp.broadcast_to(x_q.astype(cd), (nh, q_tile, H))
        q_h = jnp.einsum('hsk,hkd->hsd', xb_q, wqkv[:, :, :d],
                         preferred_element_type=jnp.float32)        # [nh, tq, d]
        kv = jnp.einsum('hsk,hkd->hsd', xb_full, wqkv[:, :, d:],
                        preferred_element_type=jnp.float32)         # [nh, S, 2d]
        k_h = kv[:, :, :d]
        v_h = kv[:, :, d:]

    # ---- scaled dot-product attention (softmax in f32, batched heads) -----
    scores = jnp.einsum('hqd,hkd->hqk', q_h.astype(cd), k_h.astype(cd),
                        preferred_element_type=jnp.float32)          # [nh, tq, S]
    m = jnp.max(scores, axis=-1, keepdims=True)
    p = jnp.exp(scores - m)
    denom = jnp.sum(p, axis=-1, keepdims=True)
    attn = p * pl.reciprocal(denom, approx=True)
    # TODO(synk): dropout on attention weights is identity at inference; the
    # per-block attention_weights cache (module side effect) is not exported.

    ctx = jnp.einsum('hqk,hkd->hqd', attn.astype(cd), v_h.astype(cd),
                     preferred_element_type=jnp.float32)             # [nh, tq, d]

    # ---- output projection: concat_h(ctx_h) @ Wo^T == sum_h ctx_h @ Wo^T[h] -
    out_h = jnp.einsum('hqd,hdk->hqk', ctx.astype(cd), wo_ref[...],
                       preferred_element_type=jnp.float32)           # [nh, tq, H]
    attn_out = jnp.sum(out_h, axis=0)                                # [tq, H]

    # ---- AddNorm 1 (dropout = identity) ------------------------------------
    y = _layer_norm(attn_out + x_q.astype(jnp.float32),
                    ln1w_ref[...], ln1b_ref[...])                    # [tq, H] f32

    # ---- position-wise FFN --------------------------------------------------
    h1 = jnp.dot(y.astype(cd), w1_ref[...],
                 preferred_element_type=jnp.float32) + b1_ref[...]
    h1 = jnp.maximum(h1, 0.0)
    h2 = jnp.dot(h1.astype(cd), w2_ref[...],
                 preferred_element_type=jnp.float32) + b2_ref[...]

    # ---- AddNorm 2 ----------------------------------------------------------
    out = _layer_norm(h2 + y, ln2w_ref[...], ln2b_ref[...])
    o_ref[0] = out.astype(o_ref.dtype)


def encoder_block(x, p, *, num_heads, compute_dtype=jnp.float32, q_tile=None):
    B, S, H = x.shape
    assert H % num_heads == 0
    d = H // num_heads
    F = p["w1"].shape[0]

    if q_tile is None:
        q_tile = S
    assert q_tile == S or (S % q_tile == 0 and q_tile % 8 == 0), \
        "q_tile must equal S, or be a multiple of 8 that divides S"
    n_q = S // q_tile

    cd = compute_dtype
    scale = 1.0 / math.sqrt(d)

    # PyTorch [out, in] weight -> head-major [nh, H_in, d] column blocks.
    def to_heads(w):
        return w.T.reshape(H, num_heads, d).transpose(1, 0, 2)

    # Fused QKV weight [nh, H, 3d]; 1/sqrt(d) folded into the Q columns.
    wqkv = jnp.concatenate(
        [to_heads(p["wq"]) * scale, to_heads(p["wk"]), to_heads(p["wv"])],
        axis=-1).astype(cd)
    wo = p["wo"].T.reshape(num_heads, d, H).astype(cd)     # [nh, d, H]
    w1 = p["w1"].T.astype(cd)                              # [H, F]
    w2 = p["w2"].T.astype(cd)                              # [F, H]
    b1 = p["b1"].reshape(1, F).astype(jnp.float32)
    b2 = p["b2"].reshape(1, H).astype(jnp.float32)
    ln1w = p["ln1_w"].reshape(1, H).astype(jnp.float32)
    ln1b = p["ln1_b"].reshape(1, H).astype(jnp.float32)
    ln2w = p["ln2_w"].reshape(1, H).astype(jnp.float32)
    ln2b = p["ln2_b"].reshape(1, H).astype(jnp.float32)

    kernel = functools.partial(
        encoder_block_kernel, num_heads=num_heads, head_dim=d,
        q_tile=q_tile, compute_dtype=cd)

    def full_spec(shape):
        n = len(shape)
        return pl.BlockSpec(shape, lambda b, qi, _n=n: (0,) * _n)

    grid_spec = pltpu.PrefetchScalarGridSpec(
        num_scalar_prefetch=0,
        grid=(B, n_q),
        in_specs=[
            pl.BlockSpec((1, S, H), lambda b, qi: (b, 0, 0)),   # x (full seq for K/V)
            full_spec((num_heads, H, 3 * d)),                   # fused QKV weight
            full_spec((num_heads, d, H)),                       # Wo (head-major rows)
            full_spec((1, H)), full_spec((1, H)),               # LN1 weight / bias
            full_spec((H, F)), full_spec((1, F)),               # FFN dense1 W / b
            full_spec((F, H)), full_spec((1, H)),               # FFN dense2 W / b
            full_spec((1, H)), full_spec((1, H)),               # LN2 weight / bias
        ],
        out_specs=pl.BlockSpec((1, q_tile, H), lambda b, qi: (b, qi, 0)),
    )

    return pl.pallas_call(
        kernel,
        out_shape=jax.ShapeDtypeStruct((B, S, H), x.dtype),
        grid_spec=grid_spec,
        compiler_params=pltpu.CompilerParams(
            dimension_semantics=("parallel", "parallel"),
            vmem_limit_bytes=_VMEM_LIMIT_BYTES),
    )(x, wqkv, wo, ln1w, ln1b, w1, b1, w2, b2, ln2w, ln2b)


def transformer_encoder_forward(x, params, *, num_heads,
                                compute_dtype=jnp.float32, q_tile=None):
    S = x.shape[1]
    pe = params["pos_encoding"][:S].astype(jnp.float32)     # [S, H]
    x = add_positional_encoding(x, pe)
    for blk in params["blocks"]:
        x = encoder_block(x, blk, num_heads=num_heads,
                          compute_dtype=compute_dtype, q_tile=q_tile)
    return x


# --------------------------------------------------------------------------- #
# Parameters + pure-JAX reference (mirrors the PyTorch module)
# --------------------------------------------------------------------------- #
def make_positional_encoding(num_hiddens, max_len):
    assert num_hiddens % 2 == 0
    pos = jnp.arange(max_len, dtype=jnp.float32)[:, None]
    div = jnp.power(10000.0, jnp.arange(0, num_hiddens, 2, dtype=jnp.float32)
                    / num_hiddens)
    ang = pos / div
    pe = jnp.zeros((max_len, num_hiddens), jnp.float32)
    pe = pe.at[:, 0::2].set(jnp.sin(ang))
    pe = pe.at[:, 1::2].set(jnp.cos(ang))
    return pe


def init_params(key, num_hiddens, ffn_num_hiddens, num_blks, max_len=64):
    H, F = num_hiddens, ffn_num_hiddens

    def xavier(k, shape):                       # PyTorch [out, in] layout
        fan_out, fan_in = shape
        std = math.sqrt(2.0 / (fan_in + fan_out))
        return std * jax.random.normal(k, shape, jnp.float32)

    # NOTE: the PyTorch init sets biases to 0 and LayerNorm affine to (1, 0);
    # small random values are used here so those code paths are exercised
    # (kernel and reference use the exact same parameter values).
    blocks = []
    for bkey in jax.random.split(key, num_blks):
        ks = jax.random.split(bkey, 12)
        blocks.append(dict(
            wq=xavier(ks[0], (H, H)),
            wk=xavier(ks[1], (H, H)),
            wv=xavier(ks[2], (H, H)),
            wo=xavier(ks[3], (H, H)),
            ln1_w=1.0 + 0.1 * jax.random.normal(ks[4], (H,), jnp.float32),
            ln1_b=0.1 * jax.random.normal(ks[5], (H,), jnp.float32),
            w1=xavier(ks[6], (F, H)),
            b1=0.1 * jax.random.normal(ks[7], (F,), jnp.float32),
            w2=xavier(ks[8], (H, F)),
            b2=0.1 * jax.random.normal(ks[9], (H,), jnp.float32),
            ln2_w=1.0 + 0.1 * jax.random.normal(ks[10], (H,), jnp.float32),
            ln2_b=0.1 * jax.random.normal(ks[11], (H,), jnp.float32),
        ))
    return dict(pos_encoding=make_positional_encoding(H, max_len), blocks=blocks)


def _reference_block(x, p, num_heads):
    B, S, H = x.shape

    def transpose_qkv(X):
        X = X.reshape(B, S, num_heads, -1).transpose(0, 2, 1, 3)
        return X.reshape(-1, S, X.shape[-1])

    def transpose_output(X):
        X = X.reshape(B, num_heads, S, -1).transpose(0, 2, 1, 3)
        return X.reshape(B, S, -1)

    def layer_norm(z, w, b):
        mu = jnp.mean(z, axis=-1, keepdims=True)
        var = jnp.mean((z - mu) ** 2, axis=-1, keepdims=True)
        return (z - mu) / jnp.sqrt(var + _LN_EPS) * w + b

    q = transpose_qkv(x @ p["wq"].T)
    k = transpose_qkv(x @ p["wk"].T)
    v = transpose_qkv(x @ p["wv"].T)
    d = q.shape[-1]
    scores = jnp.einsum('bqd,bkd->bqk', q, k) / math.sqrt(d)
    attn = jax.nn.softmax(scores, axis=-1)
    ctx = jnp.einsum('bqk,bkd->bqd', attn, v)
    attn_out = transpose_output(ctx) @ p["wo"].T
    y = layer_norm(attn_out + x, p["ln1_w"], p["ln1_b"])
    h = jnp.maximum(y @ p["w1"].T + p["b1"], 0.0)
    f = h @ p["w2"].T + p["b2"]
    return layer_norm(f + y, p["ln2_w"], p["ln2_b"])


def _reference_forward(x, params, *, num_heads):
    S = x.shape[1]
    x = x + params["pos_encoding"][None, :S, :]
    for p in params["blocks"]:
        x = _reference_block(x, p, num_heads)
    return x


# --------------------------------------------------------------------------- #
if __name__ == "__main__":
    B, S, H, F_ffn = 2, 8, 32, 64
    num_heads, num_blks = 4, 2

    key = jax.random.PRNGKey(0)
    kx, kx2, kp = jax.random.split(key, 3)
    x = jax.random.normal(kx, (B, S, H), dtype=jnp.float32)
    params = init_params(kp, H, F_ffn, num_blks, max_len=64)

    ref = _reference_forward(x, params, num_heads=num_heads)

    # f32 MXU path (tolerance covers the approximate EUP reciprocal in softmax).
    out = transformer_encoder_forward(x, params, num_heads=num_heads,
                                      compute_dtype=jnp.float32)
    out = jax.block_until_ready(out)
    assert out.shape == (B, S, H)
    assert jnp.allclose(out, ref, atol=2e-2, rtol=2e-2), \
        f"f32 max err {jnp.max(jnp.abs(out - ref))}"

    # bf16 MXU inputs (v6e/v7x peak path), f32 accumulation; looser tolerance.
    out_bf16 = transformer_encoder_forward(x, params, num_heads=num_heads,
                                           compute_dtype=jnp.bfloat16)
    out_bf16 = jax.block_until_ready(out_bf16)
    assert jnp.allclose(out_bf16, ref, atol=1e-1, rtol=1e-1), \
        f"bf16 max err {jnp.max(jnp.abs(out_bf16 - ref))}"

    # Exercise the query-tile grid axis (S=16, q_tile=8 -> grid (B, 2)).
    x2 = jax.random.normal(kx2, (B, 16, H), dtype=jnp.float32)
    out2 = transformer_encoder_forward(x2, params, num_heads=num_heads,
                                       compute_dtype=jnp.float32, q_tile=8)
    out2 = jax.block_until_ready(out2)
    ref2 = _reference_forward(x2, params, num_heads=num_heads)
    assert jnp.allclose(out2, ref2, atol=2e-2, rtol=2e-2), \
        f"tiled max err {jnp.max(jnp.abs(out2 - ref2))}"

    print("KERNEL_OK")
</pallas_src>

<mosaic_0001>
module attributes {stable_mosaic.version = 11 : i64} {
  func.func @pos_encoding_kernel(%arg0: i32, %arg1: memref<1x8x32xf32, #tpu.memory_space<vmem>>, %arg2: memref<8x32xf32, #tpu.memory_space<vmem>>, %arg3: memref<1x8x32xf32, #tpu.memory_space<vmem>>) attributes {dimension_semantics = [#tpu.dimension_semantics<parallel>], iteration_bounds = array<i64: 2>, scalar_prefetch = 0 : i64, scratch_operands = 0 : i64, tpu.core_type = #tpu.core_type<tc>, window_params = [{transform_indices = @transform_0, window_bounds = array<i64: 1, 8, 32>}, {pipeline_mode = #tpu.pipeline_mode<synchronous>, transform_indices = @transform_1, window_bounds = array<i64: 8, 32>}, {transform_indices = @transform_2, window_bounds = array<i64: 1, 8, 32>}]} {
    %c0 = arith.constant 0 : index
    %c0_0 = arith.constant 0 : index
    %c0_1 = arith.constant 0 : index
    %0 = vector.load %arg1[%c0, %c0_0, %c0_1] : memref<1x8x32xf32, #tpu.memory_space<vmem>>, vector<1x8x32xf32>
    %1 = vector.shape_cast %0 : vector<1x8x32xf32> to vector<8x32xf32>
    %c0_2 = arith.constant 0 : index
    %c0_3 = arith.constant 0 : index
    %2 = vector.load %arg2[%c0_2, %c0_3] : memref<8x32xf32, #tpu.memory_space<vmem>>, vector<8x32xf32>
    %3 = arith.addf %1, %2 : vector<8x32xf32>
    %c0_4 = arith.constant 0 : index
    %c0_5 = arith.constant 0 : index
    %c0_6 = arith.constant 0 : index
    %4 = vector.load %arg3[%c0_4, %c0_5, %c0_6] : memref<1x8x32xf32, #tpu.memory_space<vmem>>, vector<1x8x32xf32>
    %5 = vector.shape_cast %4 : vector<1x8x32xf32> to vector<8x32xf32>
    %6 = vector.shape_cast %3 : vector<8x32xf32> to vector<1x8x32xf32>
    tpu.vector_store %arg3[%c0_4, %c0_5, %c0_6], %6 {strides = array<i32>} : memref<1x8x32xf32, #tpu.memory_space<vmem>>, vector<1x8x32xf32>,
    return
  }
  func.func @transform_0(%arg0: i32) -> (i32, i32, i32) {
    %c0_i32 = arith.constant 0 : i32
    %c0_i32_0 = arith.constant 0 : i32
    %c0_i32_1 = arith.constant 0 : i32
    return %arg0, %c0_i32, %c0_i32_0 : i32, i32, i32
  }
  func.func @transform_1(%arg0: i32) -> (i32, i32) {
    %c0_i32 = arith.constant 0 : i32
    %c0_i32_0 = arith.constant 0 : i32
    %c0_i32_1 = arith.constant 0 : i32
    return %c0_i32, %c0_i32_0 : i32, i32
  }
  func.func @transform_2(%arg0: i32) -> (i32, i32, i32) {
    %c0_i32 = arith.constant 0 : i32
    %c0_i32_0 = arith.constant 0 : i32
    %c0_i32_1 = arith.constant 0 : i32
    return %arg0, %c0_i32, %c0_i32_0 : i32, i32, i32
  }
}

</mosaic_0001>

<llo_original>
// kernel: tpu_custom_call.1
$region0: #{tpu_custom_call.1}
  #allocation0 [shape = 'u32[]', space=smem, size = 0x4, offset = 0x4, fixed_abs, tag = 'smem constant byte address 0x4 - core index']
  #allocation1 [shape = 'u32[144,128]{1,0:T(1,128)}', space=vmem, size = 0x12000, scoped, tag = 'internal scratch']
  %s0 = inlined_call_operand.hbm [shape: f32[2,8,32], index: 0, kind: input, shape index: {}]
  %s1 = inlined_call_operand.hbm [shape: f32[8,32], index: 1, kind: input, shape index: {}]
  %s2 = inlined_call_operand.hbm [shape: f32[2,8,32], index: 2, kind: output, shape index: {}]
  %s3 = sld [smem:[#allocation0]]
  $region49: #{tpu_custom_call.1} parent=0
    _
  %s5 = ssub.s32 1, %s3
  %s6 = scalar_select 0, %s5, %s3
  $region1: #{tpu_custom_call.1} parent=0
    #allocation2 [shape = 'u8[8192]{0}', space=vmem, size = 0x2000, scoped, tag = 'input window, operand 0']
    #allocation3 [shape = 's32[2]{0}', space=sflag, size = 0x8, scoped, tag = 'scoped memory for tpu_custom_call.1']
    #allocation4 [shape = 's32[2]{0}', space=sflag, size = 0x8, scoped, tag = 'scoped memory for tpu_custom_call.1']
    #allocation5 [shape = 'u8[4096]{0}', space=vmem, size = 0x1000, scoped, tag = 'input window, operand 1, single buffered']
    #allocation6 [shape = 's32[1]{0}', space=sflag, size = 0x4, scoped, tag = 'scoped memory for tpu_custom_call.1']
    #allocation7 [shape = 'u8[8192]{0}', space=vmem, size = 0x2000, scoped, tag = 'output window, operand 0']
    %7 = vsyncpa [#allocation3], 0
    %s8 = scalar_lea.sflag [#allocation3], 1
    %9 = vsyncpa %s8, 0
    %10 = vsyncpa [#allocation6], 0
    %11 = vsyncpa [#allocation4], 0
    %s12 = scalar_lea.sflag [#allocation4], 1
    %13 = vsyncpa %s12, 0
    loop: start=0, step=1, limit=4
    $region2: #{tpu_custom_call.1} parent=1 // loop_pre_header
      _
    $region3: #{tpu_custom_call.1} parent=1 // loop_header
      %s15 = sphi 0, %s19
      %p16 = scmp.ge.s32.totalorder %s15, 4
      %s25 = sphi 0, %s27
      %s28 = sphi 0, %s25
      %s29 = sphi 0, %s28
      %s45 = sphi 0, %s29
      %s49 = sphi 0, %s49
      %s51 = sphi 0, %s49
      %s52 = sphi 0, %s51
      %s66 = sphi 0, %s52
      %s72 = sphi 0, %s74
      %s75 = sphi 0, %s72
      %s76 = sphi 0, %s75
      %s92 = sphi 0, %s76
    $region4: #{tpu_custom_call.1} parent=1 // loop_header_branch
      %18 = sbr.rel (%p16) target = $region8
    $region5: #{tpu_custom_call.1} parent=1 // loop_body
      %s20 = ssub.s32 %s15, 1
      %s21 = ssub.s32 %s15, 2
      %s22 = sadd.s32 %s15, 1
      %s23 = ssub.s32 %s15, %s22
      %p24 = scmp.eq.s32.totalorder %s23, 0
      %s26 = sadd.s32 %s25, 1
      %s27 = scalar_select %p24, %s25, %s26
      %p30 = pneg %p24
      %p31 = scmp.eq.s32.totalorder %s15, 1
      %p32 = por %p30, %p31
      %p33 = scmp.ne.s32.totalorder %s25, %s28
      %p34 = scmp.eq.s32.totalorder %s15, 0
      %p35 = por %p33, %p34
      %p36 = scmp.ne.s32.totalorder %s25, %s28
      %p37 = scmp.eq.s32.totalorder %s20, 1
      %p38 = por %p36, %p37
      %p39 = scmp.ne.s32.totalorder %s28, %s29
      %p40 = scmp.eq.s32.totalorder %s20, 0
      %p41 = por %p39, %p40
      %p42 = scmp.ne.s32.totalorder %s28, %s29
      %p43 = scmp.eq.s32.totalorder %s21, 1
      %p44 = por %p42, %p43
      %p46 = scmp.ne.s32.totalorder %s29, %s45
      %p47 = scmp.eq.s32.totalorder %s21, 0
      %p48 = por %p46, %p47
      %s50 = sadd.s32 %s49, 1
      %p53 = scmp.eq.s32.totalorder %s15, 1
      %p54 = scmp.ne.s32.totalorder %s49, %s51
      %p55 = scmp.eq.s32.totalorder %s15, 0
      %p56 = por %p54, %p55
      %p57 = scmp.ne.s32.totalorder %s49, %s51
      %p58 = scmp.eq.s32.totalorder %s20, 1
      %p59 = por %p57, %p58
      %p60 = scmp.ne.s32.totalorder %s51, %s52
      %p61 = scmp.eq.s32.totalorder %s20, 0
      %p62 = por %p60, %p61
      %p63 = scmp.ne.s32.totalorder %s51, %s52
      %p64 = scmp.eq.s32.totalorder %s21, 1
      %p65 = por %p63, %p64
      %p67 = scmp.ne.s32.totalorder %s52, %s66
      %p68 = scmp.eq.s32.totalorder %s21, 0
      %p69 = por %p67, %p68
      %s70 = ssub.s32 %s15, %s22
      %p71 = scmp.eq.s32.totalorder %s70, 0
      %s73 = sadd.s32 %s72, 1
      %s74 = scalar_select %p71, %s72, %s73
      %p77 = pneg %p71
      %p78 = scmp.eq.s32.totalorder %s15, 1
      %p79 = por %p77, %p78
      %p80 = scmp.ne.s32.totalorder %s72, %s75
      %p81 = scmp.eq.s32.totalorder %s15, 0
      %p82 = por %p80, %p81
      %p83 = scmp.ne.s32.totalorder %s72, %s75
      %p84 = scmp.eq.s32.totalorder %s20, 1
      %p85 = por %p83, %p84
      %p86 = scmp.ne.s32.totalorder %s75, %s76
      %p87 = scmp.eq.s32.totalorder %s20, 0
      %p88 = por %p86, %p87
      %p89 = scmp.ne.s32.totalorder %s75, %s76
      %p90 = scmp.eq.s32.totalorder %s21, 1
      %p91 = por %p89, %p90
      %p93 = scmp.ne.s32.totalorder %s76, %s92
      %p94 = scmp.eq.s32.totalorder %s21, 0
      %p95 = por %p93, %p94
      %p96 = scmp.le.s32.totalorder 1, %s15
      %p97 = scmp.lt.s32.totalorder %s15, 3
      %p98 = pnand %p96, %p97
      %p99 = pneg %p98
      // Predicated region
      $region9: #{tpu_custom_call.1} parent=5 // pred_check
        _
      $region10: #{tpu_custom_call.1} parent=5 // pred_check_branch
        %101 = sbr.rel (%p98) target = $region12
      $region11: #{tpu_custom_call.1} parent=5 // pred_region
        %s102 = ssub.s32 %s15, 1
        // Predicated region
        $region13: #{tpu_custom_call.1} parent=11 // pred_check
          %p103 = pneg %p62
        $region14: #{tpu_custom_call.1} parent=11 // pred_check_branch
          %105 = sbr.rel (%p103) target = $region16
        $region15: #{tpu_custom_call.1} parent=11 // pred_region
          %s107 = ssub.s32 128, 128
          %108 = vsyncadd [#allocation6], %s107
          %s110 = sshll.u32 [#allocation5], 4
          %s111 = int_to_ptr.vmem [resolvable:$true] %s110
          %113 = dma.hbm_to_vmem [thread:$0]  %s1, 128, %s111, [#allocation6]
        $region16: #{tpu_custom_call.1} parent=11 // pred_fallthru
          _
      $region12: #{tpu_custom_call.1} parent=5 // pred_fallthru
        _
      %p114 = scmp.lt.s32.totalorder %s15, 2
      // Predicated region
      $region17: #{tpu_custom_call.1} parent=5 // pred_check
        %p115 = pneg %p114
      $region18: #{tpu_custom_call.1} parent=5 // pred_check_branch
        %117 = sbr.rel (%p115) target = $region20
      $region19: #{tpu_custom_call.1} parent=5 // pred_region
        // Predicated region
        $region21: #{tpu_custom_call.1} parent=19 // pred_check
          %p118 = pneg %p35
        $region22: #{tpu_custom_call.1} parent=19 // pred_check_branch
          %120 = sbr.rel (%p118) target = $region24
        $region23: #{tpu_custom_call.1} parent=19 // pred_region
          %s121 = sand.u32 %s25, 1
          %s122 = scalar_lea.sflag [#allocation3], %s121
          %s123 = sand.u32 %s25, 1
          %s124 = smul.addr %s123, 8
          %s125 = scalar_lea.vmem [#allocation2], %s124
          %s127 = ssub.s32 128, 128
          %128 = vsyncadd %s122, %s127
          %s129 = smul.addr %s15, 128
          %s130 = scalar_lea.hbm %s0, %s129
          %s132 = sshll.u32 %s125, 4
          %s133 = int_to_ptr.vmem [resolvable:$true] %s132
          %135 = dma.hbm_to_vmem [thread:$0]  %s130, 128, %s133, %s122
        $region24: #{tpu_custom_call.1} parent=19 // pred_fallthru
          _
      $region20: #{tpu_custom_call.1} parent=5 // pred_fallthru
        _
      %p136 = scmp.le.s32.totalorder 1, %s15
      %p137 = scmp.lt.s32.totalorder %s15, 3
      %p138 = pnand %p136, %p137
      %p139 = pneg %p138
      // Predicated region
      $region25: #{tpu_custom_call.1} parent=5 // pred_check
        _
      $region26: #{tpu_custom_call.1} parent=5 // pred_check_branch
        %141 = sbr.rel (%p138) target = $region28
      $region27: #{tpu_custom_call.1} parent=5 // pred_region
        %s142 = ssub.s32 %s15, 1
        %s143 = sand.u32 %s28, 1
        %s144 = scalar_lea.sflag [#allocation3], %s143
        %s145 = sand.u32 %s28, 1
        %s146 = smul.addr %s145, 8
        %s147 = scalar_lea.vmem [#allocation2], %s146
        // Predicated region
        $region29: #{tpu_custom_call.1} parent=27 // pred_check
          %p148 = pneg %p41
        $region30: #{tpu_custom_call.1} parent=27 // pred_check_branch
          %150 = sbr.rel (%p148) target = $region32
        $region31: #{tpu_custom_call.1} parent=27 // pred_region
          %151 = dma.done %s144, 128
        $region32: #{tpu_custom_call.1} parent=27 // pred_fallthru
          _
        // Predicated region
        $region33: #{tpu_custom_call.1} parent=27 // pred_check
          %p152 = pneg %p62
        $region34: #{tpu_custom_call.1} parent=27 // pred_check_branch
          %154 = sbr.rel (%p152) target = $region36
        $region35: #{tpu_custom_call.1} parent=27 // pred_region
          %155 = dma.done [#allocation6], 128
        $region36: #{tpu_custom_call.1} parent=27 // pred_fallthru
          _
        %s156 = sand.u32 %s28, 1
        %s157 = scalar_lea.sflag [#allocation3], %s156
        %s158 = sand.u32 %s28, 1
        %s159 = smul.addr %s158, 8
        %s160 = scalar_lea.vmem [#allocation2], %s159
        %p161 = pneg %p41
        %p162 = pneg %p38
        %p163 = pneg %p62
        %p164 = pneg %p59
        %p165 = pneg %p88
        %p166 = pneg %p85
        %s167 = sand.u32 %s75, 1
        %s168 = scalar_lea.sflag [#allocation4], %s167
        %s169 = sand.u32 %s75, 1
        %s170 = smul.addr %s169, 8
        %s171 = scalar_lea.vmem [#allocation7], %s170
        %v172 = vld [vmem:[%s147] sm:$0xff]
        %v173 = vld [vmem:[#allocation5] sm:$0xff]
        %v174 = vadd.f32 %v172, %v173
        %vm175 = vcmask 261120
        %176 = vst.msk [vmem:[%s171] sm:$0xff] %vm175, %v174
        %s177 = sand.u32 %s75, 1
        %s178 = scalar_lea.sflag [#allocation4], %s177
        %s179 = sand.u32 %s75, 1
        %s180 = smul.addr %s179, 8
        %s181 = scalar_lea.vmem [#allocation7], %s180
        // Predicated region
        $region37: #{tpu_custom_call.1} parent=27 // pred_check
          %p182 = pneg %p85
        $region38: #{tpu_custom_call.1} parent=27 // pred_check_branch
          %184 = sbr.rel (%p182) target = $region40
        $region39: #{tpu_custom_call.1} parent=27 // pred_region
          %s186 = ssub.s32 128, 128
          %187 = vsyncadd %s178, %s186
          %s188 = smul.addr %s20, 128
          %s189 = scalar_lea.hbm %s2, %s188
          %s191 = sshll.u32 %s181, 4
          %s192 = int_to_ptr.vmem [resolvable:$true] %s191
          %194 = dma.vmem_to_hbm [thread:$0]  %s192, 128, %s189, %s178
        $region40: #{tpu_custom_call.1} parent=27 // pred_fallthru
          _
      $region28: #{tpu_custom_call.1} parent=5 // pred_fallthru
        _
      %p195 = scmp.le.s32.totalorder 2, %s15
      // Predicated region
      $region41: #{tpu_custom_call.1} parent=5 // pred_check
        %p196 = pneg %p195
      $region42: #{tpu_custom_call.1} parent=5 // pred_check_branch
        %198 = sbr.rel (%p196) target = $region44
      $region43: #{tpu_custom_call.1} parent=5 // pred_region
        %s199 = ssub.s32 %s15, 2
        // Predicated region
        $region45: #{tpu_custom_call.1} parent=43 // pred_check
          %p200 = pneg %p91
        $region46: #{tpu_custom_call.1} parent=43 // pred_check_branch
          %202 = sbr.rel (%p200) target = $region48
        $region47: #{tpu_custom_call.1} parent=43 // pred_region
          %s203 = sand.u32 %s76, 1
          %s204 = scalar_lea.sflag [#allocation4], %s203
          %s205 = sand.u32 %s76, 1
          %s206 = smul.addr %s205, 8
          %s207 = scalar_lea.vmem [#allocation7], %s206
          %208 = dma.done %s204, 128
        $region48: #{tpu_custom_call.1} parent=43 // pred_fallthru
          _
      $region44: #{tpu_custom_call.1} parent=5 // pred_fallthru
        _
    $region6: #{tpu_custom_call.1} parent=1 // loop_footer
      %s19 = sadd.s32 1, %s15
    $region7: #{tpu_custom_call.1} parent=1 // loop_footer_branch
      %14 = sbr.rel target = $region3
    $region8: #{tpu_custom_call.1} parent=1 // loop_exit
      _
    %209 = vsyncpa [#allocation3], 1
    %s210 = scalar_lea.sflag [#allocation3], 1
    %211 = vsyncpa %s210, 1
    %212 = vsyncpa [#allocation6], 1
    %213 = vsyncpa [#allocation4], 1
    %s214 = scalar_lea.sflag [#allocation4], 1
    %215 = vsyncpa %s214, 1

</llo_original>
